<compile_context>
chip_gen: v7x
topology: tpu7x:2x2x1
jax: 0.10.0
libtpu: 0.0.40
codegen_flags: <defaults>
</compile_context>

<pallas_src>
import functools

import jax
import jax.numpy as jnp
from jax import lax
from jax.experimental import pallas as pl
from jax.experimental.pallas import tpu as pltpu

EPS = 1e-5  # nn.BatchNorm2d default eps

# ---------------- small problem sizes (fit a single VMEM-resident tile) -------
N, H, W = 2, 8, 8
C_MID = 4
C_IN = C_MID * 4      # expansion = 4, identity add requires C_IN == C_OUT
C_OUT = C_MID * 4


# ------------------------------ kernel helpers ---------------------------------
def _fold_lanes(v, c):
    """(1, reps*c) -> (1, c): sum the `reps` consecutive c-wide lane blocks."""
    reps = v.shape[1] // c
    out = v[:, 0:c]
    for r in range(1, reps):
        out = out + v[:, r * c:(r + 1) * c]
    return out


def _bn_act(y, g_ref, b_ref, inv_count, relu):
    """Fused train-mode BatchNorm (+ optional ReLU) on the lane-dense layout.

    y: (n*h, w*C) with channel c of spatial column j living at lane j*C + c.
    Per-channel stats via one-pass sum / sum-of-squares (folded over rows and
    the w lane-blocks), then a single scale/bias FMA.
    """
    c = g_ref.shape[1]
    reps = y.shape[1] // c
    s1 = _fold_lanes(jnp.sum(y, axis=0, keepdims=True), c)           # (1, c)
    s2 = _fold_lanes(jnp.sum(y * y, axis=0, keepdims=True), c)       # (1, c)
    mu = s1 * inv_count
    var = s2 * inv_count - mu * mu                                   # biased
    scale = g_ref[...] * lax.rsqrt(var + EPS)                        # EUP
    bias = b_ref[...] - mu * scale
    scale_d = jnp.concatenate([scale] * reps, axis=1)                # (1, w*C)
    bias_d = jnp.concatenate([bias] * reps, axis=1)
    out = y * scale_d + bias_d
    return jnp.maximum(out, 0.0) if relu else out


# ------------------------------- Pallas kernel ----------------------------------
def bottleneck_kernel(x_ref, w1_ref, w2_ref, w3_ref,
                      g1_ref, b1_ref, g2_ref, b2_ref, g3_ref, b3_ref,
                      o_ref, *, n, h, w):
    nh = n * h
    cmid = w1_ref.shape[1] // w
    inv_count = 1.0 / float(n * h * w)

    # identity (x.clone()) -- already lane-dense (n*h, w*cin)
    x = x_ref[...].astype(jnp.float32)

    # conv1: 1x1 -> single matmul against the block-diagonal weight
    y = jnp.dot(x, w1_ref[...], preferred_element_type=jnp.float32)  # (nh, w*cmid)
    y = _bn_act(y, g1_ref, b1_ref, inv_count, relu=True)

    # conv2: 3x3, stride 1, padding 1.
    # h-offsets: sublane roll + row mask; w-offsets: folded into the banded
    # weight. Taps concatenated along lanes -> ONE im2col-style matmul.
    hh = lax.broadcasted_iota(jnp.int32, (nh, w * cmid), 0) % h
    taps = []
    for dh in (-1, 0, 1):
        if dh == 0:
            taps.append(y)
        else:
            shifted = pltpu.roll(y, shift=(-dh) % nh, axis=0)  # row i <- row i+dh
            valid = jnp.logical_and(hh + dh >= 0, hh + dh < h)
            taps.append(jnp.where(valid, shifted, 0.0))
    patch = jnp.concatenate(taps, axis=1)                      # (nh, 3*w*cmid)
    y = jnp.dot(patch, w2_ref[...], preferred_element_type=jnp.float32)
    y = _bn_act(y, g2_ref, b2_ref, inv_count, relu=True)

    # conv3: 1x1 expansion -> lane-dense (nh, w*cout)
    y = jnp.dot(y, w3_ref[...], preferred_element_type=jnp.float32)
    y = _bn_act(y, g3_ref, b3_ref, inv_count, relu=False)

    # residual add (identity_downsample is None) + final ReLU, unmasked store
    o_ref[...] = jnp.maximum(y + x, 0.0).astype(o_ref.dtype)


# --------------------------- wrapper-side weight folding -------------------------
def _block_diag(mat, reps):
    """kron(I_reps, mat): 1x1 conv weight for the (rows, w*C) dense layout."""
    return jnp.kron(jnp.eye(reps, dtype=mat.dtype), mat)


def _banded_conv2_weight(w2, w):
    """w2 (3,3,cmid,cmid) -> (3*w*cmid, w*cmid) banded matrix so that
    conv3x3_dense = concat([rowshift(-1), rowshift(0), rowshift(+1)], lanes) @ W."""
    cm = w2.shape[2]
    a = jnp.zeros((3, w * cm, w * cm), w2.dtype)
    for kh in range(3):                       # kh = dh + 1
        for j in range(w):                    # output spatial column
            for dw in (-1, 0, 1):
                j2 = j + dw                   # input spatial column
                if 0 <= j2 < w:
                    a = a.at[kh,
                             j2 * cm:(j2 + 1) * cm,
                             j * cm:(j + 1) * cm].set(w2[kh, dw + 1])
    return a.reshape(3 * w * cm, w * cm)


# ----------------------------------- wrapper -------------------------------------
def resnet_block(x_nhwc, params):
    w1, w2, w3, g1, b1, g2, b2, g3, b3 = params
    n, h, w, cin = x_nhwc.shape
    cmid = w1.shape[1]
    cout = w3.shape[1]

    # Lane-dense 2-D slabs: rows = (n, h), lanes = (w, channel). Free reshapes.
    x_dense = x_nhwc.reshape(n * h, w * cin)          # (16, 128)
    w1d = _block_diag(w1, w)                          # (w*cin,   w*cmid)
    w2d = _banded_conv2_weight(w2, w)                 # (3*w*cmid, w*cmid)
    w3d = _block_diag(w3, w)                          # (w*cmid,  w*cout)

    kernel = functools.partial(bottleneck_kernel, n=n, h=h, w=w)
    vmem = pl.BlockSpec(memory_space=pltpu.MemorySpace.VMEM)
    out_dense = pl.pallas_call(
        kernel,
        out_shape=jax.ShapeDtypeStruct((n * h, w * cout), x_nhwc.dtype),
        in_specs=[vmem] * 10,
        out_specs=vmem,
    )(x_dense, w1d, w2d, w3d, g1, b1, g2, b2, g3, b3)
    return out_dense.reshape(n, h, w, cout)


# --------------------------- plain-JAX reference ----------------------------------
def reference_block(x_nhwc, params):
    w1, w2, w3, g1, b1, g2, b2, g3, b3 = params

    def bn(y, g, b):
        mu = jnp.mean(y, axis=(0, 1, 2), keepdims=True)
        var = jnp.var(y, axis=(0, 1, 2), keepdims=True)  # biased, as in PyTorch
        return (y - mu) / jnp.sqrt(var + EPS) * g.reshape(1, 1, 1, -1) \
               + b.reshape(1, 1, 1, -1)

    y = jnp.einsum('nhwc,cd->nhwd', x_nhwc, w1)
    y = jax.nn.relu(bn(y, g1, b1))
    y = lax.conv_general_dilated(
        y, w2, window_strides=(1, 1), padding=((1, 1), (1, 1)),
        dimension_numbers=('NHWC', 'HWIO', 'NHWC'))
    y = jax.nn.relu(bn(y, g2, b2))
    y = jnp.einsum('nhwc,cd->nhwd', y, w3)
    y = bn(y, g3, b3)
    return jax.nn.relu(y + x_nhwc)


# ------------------------------------- main ---------------------------------------
if __name__ == "__main__":
    key = jax.random.PRNGKey(0)
    ks = jax.random.split(key, 11)

    # PyTorch-convention input: NCHW
    x_nchw = jax.random.normal(ks[0], (N, C_IN, H, W), jnp.float32)
    x_nhwc = jnp.transpose(x_nchw, (0, 2, 3, 1))

    # Deterministic synthetic parameters.
    # Conv weights: w1 (Cin,Cmid), w2 (kh,kw,Cin,Cout), w3 (Cmid,Cout)
    # (PyTorch (out,in,kh,kw) transposed for NHWC matmuls).
    w1 = 0.2 * jax.random.normal(ks[1], (C_IN, C_MID), jnp.float32)
    w2 = 0.2 * jax.random.normal(ks[2], (3, 3, C_MID, C_MID), jnp.float32)
    w3 = 0.2 * jax.random.normal(ks[3], (C_MID, C_OUT), jnp.float32)
    g1 = 1.0 + 0.1 * jax.random.normal(ks[4], (1, C_MID), jnp.float32)
    b1 = 0.1 * jax.random.normal(ks[5], (1, C_MID), jnp.float32)
    g2 = 1.0 + 0.1 * jax.random.normal(ks[6], (1, C_MID), jnp.float32)
    b2 = 0.1 * jax.random.normal(ks[7], (1, C_MID), jnp.float32)
    g3 = 1.0 + 0.1 * jax.random.normal(ks[8], (1, C_OUT), jnp.float32)
    b3 = 0.1 * jax.random.normal(ks[9], (1, C_OUT), jnp.float32)
    params = (w1, w2, w3, g1, b1, g2, b2, g3, b3)

    out = jax.block_until_ready(resnet_block(x_nhwc, params))
    ref = jax.block_until_ready(reference_block(x_nhwc, params))

    if not bool(jnp.allclose(out, ref, rtol=1e-3, atol=1e-3)):
        raise SystemExit(
            f"mismatch: max abs diff = {float(jnp.max(jnp.abs(out - ref)))}")

    print("KERNEL_OK")
</pallas_src>

<mosaic_0001>
module attributes {stable_mosaic.version = 11 : i64} {
  func.func @bottleneck_kernel(%arg0: memref<16x128xf32, #tpu.memory_space<vmem>>, %arg1: memref<128x32xf32, #tpu.memory_space<vmem>>, %arg2: memref<96x32xf32, #tpu.memory_space<vmem>>, %arg3: memref<32x128xf32, #tpu.memory_space<vmem>>, %arg4: memref<1x4xf32, #tpu.memory_space<vmem>>, %arg5: memref<1x4xf32, #tpu.memory_space<vmem>>, %arg6: memref<1x4xf32, #tpu.memory_space<vmem>>, %arg7: memref<1x4xf32, #tpu.memory_space<vmem>>, %arg8: memref<1x16xf32, #tpu.memory_space<vmem>>, %arg9: memref<1x16xf32, #tpu.memory_space<vmem>>, %arg10: memref<16x128xf32, #tpu.memory_space<vmem>>) attributes {dimension_semantics = [], scalar_prefetch = 0 : i64, scratch_operands = 0 : i64, tpu.core_type = #tpu.core_type<tc>} {
    %c0 = arith.constant 0 : index
    %c0_0 = arith.constant 0 : index
    %0 = vector.load %arg0[%c0, %c0_0] : memref<16x128xf32, #tpu.memory_space<vmem>>, vector<16x128xf32>
    %c0_1 = arith.constant 0 : index
    %c0_2 = arith.constant 0 : index
    %1 = vector.load %arg1[%c0_1, %c0_2] : memref<128x32xf32, #tpu.memory_space<vmem>>, vector<128x32xf32>
    %cst = arith.constant dense<0.000000e+00> : vector<16x32xf32>
    %2 = tpu.matmul %0, %1, %cst {dimension_numbers = #tpu.dot_dimension_numbers<[1], [0], [0], [1], [0, 0, 1, 1], [], []>} : vector<16x128xf32>, vector<128x32xf32>, vector<16x32xf32> -> vector<16x32xf32>
    %cst_3 = arith.constant dense<0.000000e+00> : vector<32xf32>
    %3 = vector.multi_reduction <add>, %2, %cst_3 [0] : vector<16x32xf32> to vector<32xf32>
    %4 = vector.shape_cast %3 : vector<32xf32> to vector<1x32xf32>
    %5 = vector.extract_strided_slice %4 {offsets = [0, 0], sizes = [1, 4], strides = [1, 1]} : vector<1x32xf32> to vector<1x4xf32>
    %6 = vector.extract_strided_slice %4 {offsets = [0, 4], sizes = [1, 4], strides = [1, 1]} : vector<1x32xf32> to vector<1x4xf32>
    %7 = arith.addf %5, %6 : vector<1x4xf32>
    %8 = vector.extract_strided_slice %4 {offsets = [0, 8], sizes = [1, 4], strides = [1, 1]} : vector<1x32xf32> to vector<1x4xf32>
    %9 = arith.addf %7, %8 : vector<1x4xf32>
    %10 = vector.extract_strided_slice %4 {offsets = [0, 12], sizes = [1, 4], strides = [1, 1]} : vector<1x32xf32> to vector<1x4xf32>
    %11 = arith.addf %9, %10 : vector<1x4xf32>
    %12 = vector.extract_strided_slice %4 {offsets = [0, 16], sizes = [1, 4], strides = [1, 1]} : vector<1x32xf32> to vector<1x4xf32>
    %13 = arith.addf %11, %12 : vector<1x4xf32>
    %14 = vector.extract_strided_slice %4 {offsets = [0, 20], sizes = [1, 4], strides = [1, 1]} : vector<1x32xf32> to vector<1x4xf32>
    %15 = arith.addf %13, %14 : vector<1x4xf32>
    %16 = vector.extract_strided_slice %4 {offsets = [0, 24], sizes = [1, 4], strides = [1, 1]} : vector<1x32xf32> to vector<1x4xf32>
    %17 = arith.addf %15, %16 : vector<1x4xf32>
    %18 = vector.extract_strided_slice %4 {offsets = [0, 28], sizes = [1, 4], strides = [1, 1]} : vector<1x32xf32> to vector<1x4xf32>
    %19 = arith.addf %17, %18 : vector<1x4xf32>
    %20 = arith.mulf %2, %2 : vector<16x32xf32>
    %cst_4 = arith.constant dense<0.000000e+00> : vector<32xf32>
    %21 = vector.multi_reduction <add>, %20, %cst_4 [0] : vector<16x32xf32> to vector<32xf32>
    %22 = vector.shape_cast %21 : vector<32xf32> to vector<1x32xf32>
    %23 = vector.extract_strided_slice %22 {offsets = [0, 0], sizes = [1, 4], strides = [1, 1]} : vector<1x32xf32> to vector<1x4xf32>
    %24 = vector.extract_strided_slice %22 {offsets = [0, 4], sizes = [1, 4], strides = [1, 1]} : vector<1x32xf32> to vector<1x4xf32>
    %25 = arith.addf %23, %24 : vector<1x4xf32>
    %26 = vector.extract_strided_slice %22 {offsets = [0, 8], sizes = [1, 4], strides = [1, 1]} : vector<1x32xf32> to vector<1x4xf32>
    %27 = arith.addf %25, %26 : vector<1x4xf32>
    %28 = vector.extract_strided_slice %22 {offsets = [0, 12], sizes = [1, 4], strides = [1, 1]} : vector<1x32xf32> to vector<1x4xf32>
    %29 = arith.addf %27, %28 : vector<1x4xf32>
    %30 = vector.extract_strided_slice %22 {offsets = [0, 16], sizes = [1, 4], strides = [1, 1]} : vector<1x32xf32> to vector<1x4xf32>
    %31 = arith.addf %29, %30 : vector<1x4xf32>
    %32 = vector.extract_strided_slice %22 {offsets = [0, 20], sizes = [1, 4], strides = [1, 1]} : vector<1x32xf32> to vector<1x4xf32>
    %33 = arith.addf %31, %32 : vector<1x4xf32>
    %34 = vector.extract_strided_slice %22 {offsets = [0, 24], sizes = [1, 4], strides = [1, 1]} : vector<1x32xf32> to vector<1x4xf32>
    %35 = arith.addf %33, %34 : vector<1x4xf32>
    %36 = vector.extract_strided_slice %22 {offsets = [0, 28], sizes = [1, 4], strides = [1, 1]} : vector<1x32xf32> to vector<1x4xf32>
    %37 = arith.addf %35, %36 : vector<1x4xf32>
    %cst_5 = arith.constant 7.812500e-03 : f32
    %38 = vector.broadcast %cst_5 : f32 to vector<1x4xf32>
    %39 = arith.mulf %19, %38 : vector<1x4xf32>
    %cst_6 = arith.constant 7.812500e-03 : f32
    %40 = vector.broadcast %cst_6 : f32 to vector<1x4xf32>
    %41 = arith.mulf %37, %40 : vector<1x4xf32>
    %42 = arith.mulf %39, %39 : vector<1x4xf32>
    %43 = arith.subf %41, %42 : vector<1x4xf32>
    %c0_7 = arith.constant 0 : index
    %c0_8 = arith.constant 0 : index
    %44 = vector.load %arg4[%c0_7, %c0_8] : memref<1x4xf32, #tpu.memory_space<vmem>>, vector<1x4xf32>
    %cst_9 = arith.constant 9.99999974E-6 : f32
    %45 = vector.broadcast %cst_9 : f32 to vector<1x4xf32>
    %46 = arith.addf %43, %45 : vector<1x4xf32>
    %47 = math.rsqrt %46 : vector<1x4xf32>
    %48 = arith.mulf %44, %47 : vector<1x4xf32>
    %c0_10 = arith.constant 0 : index
    %c0_11 = arith.constant 0 : index
    %49 = vector.load %arg5[%c0_10, %c0_11] : memref<1x4xf32, #tpu.memory_space<vmem>>, vector<1x4xf32>
    %50 = arith.mulf %39, %48 : vector<1x4xf32>
    %51 = arith.subf %49, %50 : vector<1x4xf32>
    %52 = tpu.concatenate %48, %48, %48, %48, %48, %48, %48, %48 in 1 : vector<1x4xf32>, vector<1x4xf32>, vector<1x4xf32>, vector<1x4xf32>, vector<1x4xf32>, vector<1x4xf32>, vector<1x4xf32>, vector<1x4xf32> -> vector<1x32xf32>
    %53 = tpu.concatenate %51, %51, %51, %51, %51, %51, %51, %51 in 1 : vector<1x4xf32>, vector<1x4xf32>, vector<1x4xf32>, vector<1x4xf32>, vector<1x4xf32>, vector<1x4xf32>, vector<1x4xf32>, vector<1x4xf32> -> vector<1x32xf32>
    %54 = vector.broadcast %52 : vector<1x32xf32> to vector<16x32xf32>
    %55 = arith.mulf %2, %54 : vector<16x32xf32>
    %56 = vector.broadcast %53 : vector<1x32xf32> to vector<16x32xf32>
    %57 = arith.addf %55, %56 : vector<16x32xf32>
    %cst_12 = arith.constant 0.000000e+00 : f32
    %58 = vector.broadcast %cst_12 : f32 to vector<16x32xf32>
    %59 = arith.maximumf %57, %58 : vector<16x32xf32>
    %60 = tpu.iota {dimensions = array<i32: 0>} : vector<16x32xi32>
    %c8_i32 = arith.constant 8 : i32
    %c0_i32 = arith.constant 0 : i32
    %61 = arith.cmpi eq, %c8_i32, %c0_i32 : i32
    %c1_i32 = arith.constant 1 : i32
    %62 = arith.select %61, %c1_i32, %c8_i32 : i32
    %63 = vector.broadcast %62 : i32 to vector<16x32xi32>
    %64 = arith.remsi %60, %63 : vector<16x32xi32>
    %c0_i32_13 = arith.constant 0 : i32
    %65 = vector.broadcast %c0_i32_13 : i32 to vector<16x32xi32>
    %66 = arith.cmpi ne, %64, %65 : vector<16x32xi32>
    %c0_i32_14 = arith.constant 0 : i32
    %67 = vector.broadcast %c0_i32_14 : i32 to vector<16x32xi32>
    %68 = arith.cmpi slt, %64, %67 : vector<16x32xi32>
    %c0_i32_15 = arith.constant 0 : i32
    %69 = arith.cmpi slt, %62, %c0_i32_15 : i32
    %70 = vector.broadcast %69 : i1 to vector<16x32xi1>
    %71 = vector.broadcast %70 : vector<16x32xi1> to vector<16x32xi1>
    %72 = arith.xori %68, %71 : vector<16x32xi1>
    %73 = arith.andi %72, %66 : vector<16x32xi1>
    %74 = vector.broadcast %62 : i32 to vector<16x32xi32>
    %75 = arith.addi %64, %74 : vector<16x32xi32>
    %76 = arith.select %73, %75, %64 : vector<16x32xi1>, vector<16x32xi32>
    %c1_i32_16 = arith.constant 1 : i32
    %77 = tpu.dynamic_rotate %59 by %c1_i32_16 dim 0 : vector<16x32xf32>, i32 -> vector<16x32xf32>
    %c-1_i32 = arith.constant -1 : i32
    %78 = vector.broadcast %c-1_i32 : i32 to vector<16x32xi32>
    %79 = arith.addi %76, %78 : vector<16x32xi32>
    %c0_i32_17 = arith.constant 0 : i32
    %80 = vector.broadcast %c0_i32_17 : i32 to vector<16x32xi32>
    %81 = arith.cmpi sge, %79, %80 : vector<16x32xi32>
    %c-1_i32_18 = arith.constant -1 : i32
    %82 = vector.broadcast %c-1_i32_18 : i32 to vector<16x32xi32>
    %83 = arith.addi %76, %82 : vector<16x32xi32>
    %c8_i32_19 = arith.constant 8 : i32
    %84 = vector.broadcast %c8_i32_19 : i32 to vector<16x32xi32>
    %85 = arith.cmpi slt, %83, %84 : vector<16x32xi32>
    %86 = arith.andi %81, %85 : vector<16x32xi1>
    %cst_20 = arith.constant 0.000000e+00 : f32
    %87 = vector.broadcast %cst_20 : f32 to vector<16x32xf32>
    %88 = arith.select %86, %77, %87 : vector<16x32xi1>, vector<16x32xf32>
    %c15_i32 = arith.constant 15 : i32
    %89 = tpu.dynamic_rotate %59 by %c15_i32 dim 0 : vector<16x32xf32>, i32 -> vector<16x32xf32>
    %c1_i32_21 = arith.constant 1 : i32
    %90 = vector.broadcast %c1_i32_21 : i32 to vector<16x32xi32>
    %91 = arith.addi %76, %90 : vector<16x32xi32>
    %c0_i32_22 = arith.constant 0 : i32
    %92 = vector.broadcast %c0_i32_22 : i32 to vector<16x32xi32>
    %93 = arith.cmpi sge, %91, %92 : vector<16x32xi32>
    %c1_i32_23 = arith.constant 1 : i32
    %94 = vector.broadcast %c1_i32_23 : i32 to vector<16x32xi32>
    %95 = arith.addi %76, %94 : vector<16x32xi32>
    %c8_i32_24 = arith.constant 8 : i32
    %96 = vector.broadcast %c8_i32_24 : i32 to vector<16x32xi32>
    %97 = arith.cmpi slt, %95, %96 : vector<16x32xi32>
    %98 = arith.andi %93, %97 : vector<16x32xi1>
    %cst_25 = arith.constant 0.000000e+00 : f32
    %99 = vector.broadcast %cst_25 : f32 to vector<16x32xf32>
    %100 = arith.select %98, %89, %99 : vector<16x32xi1>, vector<16x32xf32>
    %101 = tpu.concatenate %88, %59, %100 in 1 : vector<16x32xf32>, vector<16x32xf32>, vector<16x32xf32> -> vector<16x96xf32>
    %c0_26 = arith.constant 0 : index
    %c0_27 = arith.constant 0 : index
    %102 = vector.load %arg2[%c0_26, %c0_27] : memref<96x32xf32, #tpu.memory_space<vmem>>, vector<96x32xf32>
    %cst_28 = arith.constant dense<0.000000e+00> : vector<16x32xf32>
    %103 = tpu.matmul %101, %102, %cst_28 {dimension_numbers = #tpu.dot_dimension_numbers<[1], [0], [0], [1], [0, 0, 1, 1], [], []>} : vector<16x96xf32>, vector<96x32xf32>, vector<16x32xf32> -> vector<16x32xf32>
    %cst_29 = arith.constant dense<0.000000e+00> : vector<32xf32>
    %104 = vector.multi_reduction <add>, %103, %cst_29 [0] : vector<16x32xf32> to vector<32xf32>
    %105 = vector.shape_cast %104 : vector<32xf32> to vector<1x32xf32>
    %106 = vector.extract_strided_slice %105 {offsets = [0, 0], sizes = [1, 4], strides = [1, 1]} : vector<1x32xf32> to vector<1x4xf32>
    %107 = vector.extract_strided_slice %105 {offsets = [0, 4], sizes = [1, 4], strides = [1, 1]} : vector<1x32xf32> to vector<1x4xf32>
    %108 = arith.addf %106, %107 : vector<1x4xf32>
    %109 = vector.extract_strided_slice %105 {offsets = [0, 8], sizes = [1, 4], strides = [1, 1]} : vector<1x32xf32> to vector<1x4xf32>
    %110 = arith.addf %108, %109 : vector<1x4xf32>
    %111 = vector.extract_strided_slice %105 {offsets = [0, 12], sizes = [1, 4], strides = [1, 1]} : vector<1x32xf32> to vector<1x4xf32>
    %112 = arith.addf %110, %111 : vector<1x4xf32>
    %113 = vector.extract_strided_slice %105 {offsets = [0, 16], sizes = [1, 4], strides = [1, 1]} : vector<1x32xf32> to vector<1x4xf32>
    %114 = arith.addf %112, %113 : vector<1x4xf32>
    %115 = vector.extract_strided_slice %105 {offsets = [0, 20], sizes = [1, 4], strides = [1, 1]} : vector<1x32xf32> to vector<1x4xf32>
    %116 = arith.addf %114, %115 : vector<1x4xf32>
    %117 = vector.extract_strided_slice %105 {offsets = [0, 24], sizes = [1, 4], strides = [1, 1]} : vector<1x32xf32> to vector<1x4xf32>
    %118 = arith.addf %116, %117 : vector<1x4xf32>
    %119 = vector.extract_strided_slice %105 {offsets = [0, 28], sizes = [1, 4], strides = [1, 1]} : vector<1x32xf32> to vector<1x4xf32>
    %120 = arith.addf %118, %119 : vector<1x4xf32>
    %121 = arith.mulf %103, %103 : vector<16x32xf32>
    %cst_30 = arith.constant dense<0.000000e+00> : vector<32xf32>
    %122 = vector.multi_reduction <add>, %121, %cst_30 [0] : vector<16x32xf32> to vector<32xf32>
    %123 = vector.shape_cast %122 : vector<32xf32> to vector<1x32xf32>
    %124 = vector.extract_strided_slice %123 {offsets = [0, 0], sizes = [1, 4], strides = [1, 1]} : vector<1x32xf32> to vector<1x4xf32>
    %125 = vector.extract_strided_slice %123 {offsets = [0, 4], sizes = [1, 4], strides = [1, 1]} : vector<1x32xf32> to vector<1x4xf32>
    %126 = arith.addf %124, %125 : vector<1x4xf32>
    %127 = vector.extract_strided_slice %123 {offsets = [0, 8], sizes = [1, 4], strides = [1, 1]} : vector<1x32xf32> to vector<1x4xf32>
    %128 = arith.addf %126, %127 : vector<1x4xf32>
    %129 = vector.extract_strided_slice %123 {offsets = [0, 12], sizes = [1, 4], strides = [1, 1]} : vector<1x32xf32> to vector<1x4xf32>
    %130 = arith.addf %128, %129 : vector<1x4xf32>
    %131 = vector.extract_strided_slice %123 {offsets = [0, 16], sizes = [1, 4], strides = [1, 1]} : vector<1x32xf32> to vector<1x4xf32>
    %132 = arith.addf %130, %131 : vector<1x4xf32>
    %133 = vector.extract_strided_slice %123 {offsets = [0, 20], sizes = [1, 4], strides = [1, 1]} : vector<1x32xf32> to vector<1x4xf32>
    %134 = arith.addf %132, %133 : vector<1x4xf32>
    %135 = vector.extract_strided_slice %123 {offsets = [0, 24], sizes = [1, 4], strides = [1, 1]} : vector<1x32xf32> to vector<1x4xf32>
    %136 = arith.addf %134, %135 : vector<1x4xf32>
    %137 = vector.extract_strided_slice %123 {offsets = [0, 28], sizes = [1, 4], strides = [1, 1]} : vector<1x32xf32> to vector<1x4xf32>
    %138 = arith.addf %136, %137 : vector<1x4xf32>
    %cst_31 = arith.constant 7.812500e-03 : f32
    %139 = vector.broadcast %cst_31 : f32 to vector<1x4xf32>
    %140 = arith.mulf %120, %139 : vector<1x4xf32>
    %cst_32 = arith.constant 7.812500e-03 : f32
    %141 = vector.broadcast %cst_32 : f32 to vector<1x4xf32>
    %142 = arith.mulf %138, %141 : vector<1x4xf32>
    %143 = arith.mulf %140, %140 : vector<1x4xf32>
    %144 = arith.subf %142, %143 : vector<1x4xf32>
    %c0_33 = arith.constant 0 : index
    %c0_34 = arith.constant 0 : index
    %145 = vector.load %arg6[%c0_33, %c0_34] : memref<1x4xf32, #tpu.memory_space<vmem>>, vector<1x4xf32>
    %cst_35 = arith.constant 9.99999974E-6 : f32
    %146 = vector.broadcast %cst_35 : f32 to vector<1x4xf32>
    %147 = arith.addf %144, %146 : vector<1x4xf32>
    %148 = math.rsqrt %147 : vector<1x4xf32>
    %149 = arith.mulf %145, %148 : vector<1x4xf32>
    %c0_36 = arith.constant 0 : index
    %c0_37 = arith.constant 0 : index
    %150 = vector.load %arg7[%c0_36, %c0_37] : memref<1x4xf32, #tpu.memory_space<vmem>>, vector<1x4xf32>
    %151 = arith.mulf %140, %149 : vector<1x4xf32>
    %152 = arith.subf %150, %151 : vector<1x4xf32>
    %153 = tpu.concatenate %149, %149, %149, %149, %149, %149, %149, %149 in 1 : vector<1x4xf32>, vector<1x4xf32>, vector<1x4xf32>, vector<1x4xf32>, vector<1x4xf32>, vector<1x4xf32>, vector<1x4xf32>, vector<1x4xf32> -> vector<1x32xf32>
    %154 = tpu.concatenate %152, %152, %152, %152, %152, %152, %152, %152 in 1 : vector<1x4xf32>, vector<1x4xf32>, vector<1x4xf32>, vector<1x4xf32>, vector<1x4xf32>, vector<1x4xf32>, vector<1x4xf32>, vector<1x4xf32> -> vector<1x32xf32>
    %155 = vector.broadcast %153 : vector<1x32xf32> to vector<16x32xf32>
    %156 = arith.mulf %103, %155 : vector<16x32xf32>
    %157 = vector.broadcast %154 : vector<1x32xf32> to vector<16x32xf32>
    %158 = arith.addf %156, %157 : vector<16x32xf32>
    %cst_38 = arith.constant 0.000000e+00 : f32
    %159 = vector.broadcast %cst_38 : f32 to vector<16x32xf32>
    %160 = arith.maximumf %158, %159 : vector<16x32xf32>
    %c0_39 = arith.constant 0 : index
    %c0_40 = arith.constant 0 : index
    %161 = vector.load %arg3[%c0_39, %c0_40] : memref<32x128xf32, #tpu.memory_space<vmem>>, vector<32x128xf32>
    %cst_41 = arith.constant dense<0.000000e+00> : vector<16x128xf32>
    %162 = tpu.matmul %160, %161, %cst_41 {dimension_numbers = #tpu.dot_dimension_numbers<[1], [0], [0], [1], [0, 0, 1, 1], [], []>} : vector<16x32xf32>, vector<32x128xf32>, vector<16x128xf32> -> vector<16x128xf32>
    %cst_42 = arith.constant dense<0.000000e+00> : vector<128xf32>
    %163 = vector.multi_reduction <add>, %162, %cst_42 [0] : vector<16x128xf32> to vector<128xf32>
    %164 = vector.shape_cast %163 : vector<128xf32> to vector<1x128xf32>
    %165 = vector.extract_strided_slice %164 {offsets = [0, 0], sizes = [1, 16], strides = [1, 1]} : vector<1x128xf32> to vector<1x16xf32>
    %166 = vector.extract_strided_slice %164 {offsets = [0, 16], sizes = [1, 16], strides = [1, 1]} : vector<1x128xf32> to vector<1x16xf32>
    %167 = arith.addf %165, %166 : vector<1x16xf32>
    %168 = vector.extract_strided_slice %164 {offsets = [0, 32], sizes = [1, 16], strides = [1, 1]} : vector<1x128xf32> to vector<1x16xf32>
    %169 = arith.addf %167, %168 : vector<1x16xf32>
    %170 = vector.extract_strided_slice %164 {offsets = [0, 48], sizes = [1, 16], strides = [1, 1]} : vector<1x128xf32> to vector<1x16xf32>
    %171 = arith.addf %169, %170 : vector<1x16xf32>
    %172 = vector.extract_strided_slice %164 {offsets = [0, 64], sizes = [1, 16], strides = [1, 1]} : vector<1x128xf32> to vector<1x16xf32>
    %173 = arith.addf %171, %172 : vector<1x16xf32>
    %174 = vector.extract_strided_slice %164 {offsets = [0, 80], sizes = [1, 16], strides = [1, 1]} : vector<1x128xf32> to vector<1x16xf32>
    %175 = arith.addf %173, %174 : vector<1x16xf32>
    %176 = vector.extract_strided_slice %164 {offsets = [0, 96], sizes = [1, 16], strides = [1, 1]} : vector<1x128xf32> to vector<1x16xf32>
    %177 = arith.addf %175, %176 : vector<1x16xf32>
    %178 = vector.extract_strided_slice %164 {offsets = [0, 112], sizes = [1, 16], strides = [1, 1]} : vector<1x128xf32> to vector<1x16xf32>
    %179 = arith.addf %177, %178 : vector<1x16xf32>
    %180 = arith.mulf %162, %162 : vector<16x128xf32>
    %cst_43 = arith.constant dense<0.000000e+00> : vector<128xf32>
    %181 = vector.multi_reduction <add>, %180, %cst_43 [0] : vector<16x128xf32> to vector<128xf32>
    %182 = vector.shape_cast %181 : vector<128xf32> to vector<1x128xf32>
    %183 = vector.extract_strided_slice %182 {offsets = [0, 0], sizes = [1, 16], strides = [1, 1]} : vector<1x128xf32> to vector<1x16xf32>
    %184 = vector.extract_strided_slice %182 {offsets = [0, 16], sizes = [1, 16], strides = [1, 1]} : vector<1x128xf32> to vector<1x16xf32>
    %185 = arith.addf %183, %184 : vector<1x16xf32>
    %186 = vector.extract_strided_slice %182 {offsets = [0, 32], sizes = [1, 16], strides = [1, 1]} : vector<1x128xf32> to vector<1x16xf32>
    %187 = arith.addf %185, %186 : vector<1x16xf32>
    %188 = vector.extract_strided_slice %182 {offsets = [0, 48], sizes = [1, 16], strides = [1, 1]} : vector<1x128xf32> to vector<1x16xf32>
    %189 = arith.addf %187, %188 : vector<1x16xf32>
    %190 = vector.extract_strided_slice %182 {offsets = [0, 64], sizes = [1, 16], strides = [1, 1]} : vector<1x128xf32> to vector<1x16xf32>
    %191 = arith.addf %189, %190 : vector<1x16xf32>
    %192 = vector.extract_strided_slice %182 {offsets = [0, 80], sizes = [1, 16], strides = [1, 1]} : vector<1x128xf32> to vector<1x16xf32>
    %193 = arith.addf %191, %192 : vector<1x16xf32>
    %194 = vector.extract_strided_slice %182 {offsets = [0, 96], sizes = [1, 16], strides = [1, 1]} : vector<1x128xf32> to vector<1x16xf32>
    %195 = arith.addf %193, %194 : vector<1x16xf32>
    %196 = vector.extract_strided_slice %182 {offsets = [0, 112], sizes = [1, 16], strides = [1, 1]} : vector<1x128xf32> to vector<1x16xf32>
    %197 = arith.addf %195, %196 : vector<1x16xf32>
    %cst_44 = arith.constant 7.812500e-03 : f32
    %198 = vector.broadcast %cst_44 : f32 to vector<1x16xf32>
    %199 = arith.mulf %179, %198 : vector<1x16xf32>
    %cst_45 = arith.constant 7.812500e-03 : f32
    %200 = vector.broadcast %cst_45 : f32 to vector<1x16xf32>
    %201 = arith.mulf %197, %200 : vector<1x16xf32>
    %202 = arith.mulf %199, %199 : vector<1x16xf32>
    %203 = arith.subf %201, %202 : vector<1x16xf32>
    %c0_46 = arith.constant 0 : index
    %c0_47 = arith.constant 0 : index
    %204 = vector.load %arg8[%c0_46, %c0_47] : memref<1x16xf32, #tpu.memory_space<vmem>>, vector<1x16xf32>
    %cst_48 = arith.constant 9.99999974E-6 : f32
    %205 = vector.broadcast %cst_48 : f32 to vector<1x16xf32>
    %206 = arith.addf %203, %205 : vector<1x16xf32>
    %207 = math.rsqrt %206 : vector<1x16xf32>
    %208 = arith.mulf %204, %207 : vector<1x16xf32>
    %c0_49 = arith.constant 0 : index
    %c0_50 = arith.constant 0 : index
    %209 = vector.load %arg9[%c0_49, %c0_50] : memref<1x16xf32, #tpu.memory_space<vmem>>, vector<1x16xf32>
    %210 = arith.mulf %199, %208 : vector<1x16xf32>
    %211 = arith.subf %209, %210 : vector<1x16xf32>
    %212 = tpu.concatenate %208, %208, %208, %208, %208, %208, %208, %208 in 1 : vector<1x16xf32>, vector<1x16xf32>, vector<1x16xf32>, vector<1x16xf32>, vector<1x16xf32>, vector<1x16xf32>, vector<1x16xf32>, vector<1x16xf32> -> vector<1x128xf32>
    %213 = tpu.concatenate %211, %211, %211, %211, %211, %211, %211, %211 in 1 : vector<1x16xf32>, vector<1x16xf32>, vector<1x16xf32>, vector<1x16xf32>, vector<1x16xf32>, vector<1x16xf32>, vector<1x16xf32>, vector<1x16xf32> -> vector<1x128xf32>
    %214 = vector.broadcast %212 : vector<1x128xf32> to vector<16x128xf32>
    %215 = arith.mulf %162, %214 : vector<16x128xf32>
    %216 = vector.broadcast %213 : vector<1x128xf32> to vector<16x128xf32>
    %217 = arith.addf %215, %216 : vector<16x128xf32>
    %218 = arith.addf %217, %0 : vector<16x128xf32>
    %cst_51 = arith.constant 0.000000e+00 : f32
    %219 = vector.broadcast %cst_51 : f32 to vector<16x128xf32>
    %220 = arith.maximumf %218, %219 : vector<16x128xf32>
    %c0_52 = arith.constant 0 : index
    %c0_53 = arith.constant 0 : index
    %221 = vector.load %arg10[%c0_52, %c0_53] : memref<16x128xf32, #tpu.memory_space<vmem>>, vector<16x128xf32>
    tpu.vector_store %arg10[%c0_52, %c0_53], %220 {strides = array<i32>} : memref<16x128xf32, #tpu.memory_space<vmem>>, vector<16x128xf32>,
    return
  }
}

</mosaic_0001>

<llo_original>
// kernel: tpu_custom_call.1
$region0: #{tpu_custom_call.1}
  #allocation0 [shape = 'u32[]', space=smem, size = 0x4, offset = 0x4, fixed_abs, tag = 'smem constant byte address 0x4 - core index']
  #allocation1 [shape = 'u32[144,128]{1,0:T(1,128)}', space=vmem, size = 0x12000, scoped, tag = 'internal scratch']
  %s0 = inlined_call_operand.vmem [shape: f32[16,128], index: 0, kind: input, shape index: {}]
  %s1 = inlined_call_operand.vmem [shape: f32[128,32], index: 1, kind: input, shape index: {}]
  %s2 = inlined_call_operand.vmem [shape: f32[96,32], index: 2, kind: input, shape index: {}]
  %s3 = inlined_call_operand.vmem [shape: f32[32,128], index: 3, kind: input, shape index: {}]
  %s4 = inlined_call_operand.vmem [shape: f32[1,4], index: 4, kind: input, shape index: {}]
  %s5 = inlined_call_operand.vmem [shape: f32[1,4], index: 5, kind: input, shape index: {}]
  %s6 = inlined_call_operand.vmem [shape: f32[1,4], index: 6, kind: input, shape index: {}]
  %s7 = inlined_call_operand.vmem [shape: f32[1,4], index: 7, kind: input, shape index: {}]
  %s8 = inlined_call_operand.vmem [shape: f32[1,16], index: 8, kind: input, shape index: {}]
  %s9 = inlined_call_operand.vmem [shape: f32[1,16], index: 9, kind: input, shape index: {}]
  %s10 = inlined_call_operand.hbm [shape: f32[16,128], index: 10, kind: output, shape index: {}]
  %s11 = sld [smem:[#allocation0]]
  $region50: #{tpu_custom_call.1} parent=0
    _
  %s13 = ssub.s32 1, %s11
  %s14 = scalar_select 0, %s13, %s11
  $region1: #{tpu_custom_call.1} parent=0
    #allocation2 [shape = 'u8[8192]{0}', space=vmem, size = 0x2000, scoped, tag = 'output window, operand 0, single buffered']
    #allocation3 [shape = 's32[1]{0}', space=sflag, size = 0x4, scoped, tag = 'scoped memory for tpu_custom_call.1']
    %15 = vsyncpa [#allocation3], 0
    // Predicated region
    $region2: #{tpu_custom_call.1} parent=1 // pred_check
      _
    $region3: #{tpu_custom_call.1} parent=1 // pred_check_branch
      %17 = sbr.rel (0) target = $region5
    $region4: #{tpu_custom_call.1} parent=1 // pred_region
      _
    $region5: #{tpu_custom_call.1} parent=1 // pred_fallthru
      _
    // Predicated region
    $region6: #{tpu_custom_call.1} parent=1 // pred_check
      _
    $region7: #{tpu_custom_call.1} parent=1 // pred_check_branch
      %19 = sbr.rel (0) target = $region9
    $region8: #{tpu_custom_call.1} parent=1 // pred_region
      _
    $region9: #{tpu_custom_call.1} parent=1 // pred_fallthru
      _
    // Predicated region
    $region10: #{tpu_custom_call.1} parent=1 // pred_check
      _
    $region11: #{tpu_custom_call.1} parent=1 // pred_check_branch
      %21 = sbr.rel (0) target = $region13
    $region12: #{tpu_custom_call.1} parent=1 // pred_region
      _
    $region13: #{tpu_custom_call.1} parent=1 // pred_fallthru
      _
    // Predicated region
    $region14: #{tpu_custom_call.1} parent=1 // pred_check
      _
    $region15: #{tpu_custom_call.1} parent=1 // pred_check_branch
      %23 = sbr.rel (0) target = $region17
    $region16: #{tpu_custom_call.1} parent=1 // pred_region
      _
    $region17: #{tpu_custom_call.1} parent=1 // pred_fallthru
      _
    // Predicated region
    $region18: #{tpu_custom_call.1} parent=1 // pred_check
      _
    $region19: #{tpu_custom_call.1} parent=1 // pred_check_branch
      %25 = sbr.rel (0) target = $region21
    $region20: #{tpu_custom_call.1} parent=1 // pred_region
      _
    $region21: #{tpu_custom_call.1} parent=1 // pred_fallthru
      _
    // Predicated region
    $region22: #{tpu_custom_call.1} parent=1 // pred_check
      _
    $region23: #{tpu_custom_call.1} parent=1 // pred_check_branch
      %27 = sbr.rel (0) target = $region25
    $region24: #{tpu_custom_call.1} parent=1 // pred_region
      _
    $region25: #{tpu_custom_call.1} parent=1 // pred_fallthru
      _
    // Predicated region
    $region26: #{tpu_custom_call.1} parent=1 // pred_check
      _
    $region27: #{tpu_custom_call.1} parent=1 // pred_check_branch
      %29 = sbr.rel (0) target = $region29
    $region28: #{tpu_custom_call.1} parent=1 // pred_region
      _
    $region29: #{tpu_custom_call.1} parent=1 // pred_fallthru
      _
    // Predicated region
    $region30: #{tpu_custom_call.1} parent=1 // pred_check
      _
    $region31: #{tpu_custom_call.1} parent=1 // pred_check_branch
      %31 = sbr.rel (0) target = $region33
    $region32: #{tpu_custom_call.1} parent=1 // pred_region
      _
    $region33: #{tpu_custom_call.1} parent=1 // pred_fallthru
      _
    // Predicated region
    $region34: #{tpu_custom_call.1} parent=1 // pred_check
      _
    $region35: #{tpu_custom_call.1} parent=1 // pred_check_branch
      %33 = sbr.rel (0) target = $region37
    $region36: #{tpu_custom_call.1} parent=1 // pred_region
      _
    $region37: #{tpu_custom_call.1} parent=1 // pred_fallthru
      _
    // Predicated region
    $region38: #{tpu_custom_call.1} parent=1 // pred_check
      _
    $region39: #{tpu_custom_call.1} parent=1 // pred_check_branch
      %35 = sbr.rel (0) target = $region41
    $region40: #{tpu_custom_call.1} parent=1 // pred_region
      _
    $region41: #{tpu_custom_call.1} parent=1 // pred_fallthru
      _
    %v36 = vld [vmem:[%s0] sm:$0xff]
    %v37 = vld [vmem:[%s0 + $0x8] sm:$0xff]
    %v38 = vld [vmem:[%s1] sm:$0xff]
    %v39 = vld [vmem:[%s1 + $0x8] sm:$0xff]
    %v40 = vld [vmem:[%s1 + $0x10] sm:$0xff]
    %v41 = vld [vmem:[%s1 + $0x18] sm:$0xff]
    %v42 = vld [vmem:[%s1 + $0x20] sm:$0xff]
    %v43 = vld [vmem:[%s1 + $0x28] sm:$0xff]
    %v44 = vld [vmem:[%s1 + $0x30] sm:$0xff]
    %v45 = vld [vmem:[%s1 + $0x38] sm:$0xff]
    %v46 = vld [vmem:[%s1 + $0x40] sm:$0xff]
    %v47 = vld [vmem:[%s1 + $0x48] sm:$0xff]
    %v48 = vld [vmem:[%s1 + $0x50] sm:$0xff]
    %v49 = vld [vmem:[%s1 + $0x58] sm:$0xff]
    %v50 = vld [vmem:[%s1 + $0x60] sm:$0xff]
    %v51 = vld [vmem:[%s1 + $0x68] sm:$0xff]
    %v52 = vld [vmem:[%s1 + $0x70] sm:$0xff]
    %v53 = vld [vmem:[%s1 + $0x78] sm:$0xff]
    %54 = vmatprep.subr.mxu0 0.0
    %55 = vmatpush1.msra.mxu0 %v38
    %56 = vmatprep.subr.mxu0 0.0
    %57 = vmatpush1.msra.mxu0 %v39
    %58 = vmatprep.subr.mxu0 0.0
    %59 = vmatpush1.msra.mxu0 %v40
    %60 = vmatprep.subr.mxu0 0.0
    %61 = vmatpush1.msra.mxu0 %v41
    %62 = vmatprep.subr.mxu0 0.0
    %63 = vmatpush1.msra.mxu0 %v42
    %64 = vmatprep.subr.mxu0 0.0
    %65 = vmatpush1.msra.mxu0 %v43
    %66 = vmatprep.subr.mxu0 0.0
    %67 = vmatpush1.msra.mxu0 %v44
    %68 = vmatprep.subr.mxu0 0.0
    %69 = vmatpush1.msra.mxu0 %v45
    %70 = vmatprep.subr.mxu0 0.0
    %71 = vmatpush1.msra.mxu0 %v46
    %72 = vmatprep.subr.mxu0 0.0
    %73 = vmatpush1.msra.mxu0 %v47
    %74 = vmatprep.subr.mxu0 0.0
    %75 = vmatpush1.msra.mxu0 %v48
    %76 = vmatprep.subr.mxu0 0.0
    %77 = vmatpush1.msra.mxu0 %v49
    %78 = vmatprep.subr.mxu0 0.0
    %79 = vmatpush1.msra.mxu0 %v50
    %80 = vmatprep.subr.mxu0 0.0
    %81 = vmatpush1.msra.mxu0 %v51
    %82 = vmatprep.subr.mxu0 0.0
    %83 = vmatpush1.msra.mxu0 %v52
    %84 = vmatprep.subr.mxu0 0.0
    %85 = vmatpush1.msra.mxu0 %v53
    %86 = vmatprep.subr.mxu0 0.0
    %87 = vmatpush1.msra.mxu0 0.0
    %88 = vmatprep.subr.mxu0 0.0
    %89 = vmatpush1.msra.mxu0 0.0
    %90 = vmatprep.subr.mxu0 0.0
    %91 = vmatpush1.msra.mxu0 0.0
    %92 = vmatprep.subr.mxu0 0.0
    %93 = vmatpush1.msra.mxu0 0.0
    %94 = vmatprep.subr.mxu0 0.0
    %95 = vmatpush1.msra.mxu0 0.0
    %96 = vmatprep.subr.mxu0 0.0
    %97 = vmatpush1.msra.mxu0 0.0
    %98 = vmatprep.subr.mxu0 0.0
    %99 = vmatpush1.msra.mxu0 0.0
    %100 = vmatprep.subr.mxu0 0.0
    %101 = vmatpush1.msra.mxu0 0.0
    %102 = vmatprep.subr.mxu0 0.0
    %103 = vmatpush1.msra.mxu0 0.0
    %104 = vmatprep.subr.mxu0 0.0
    %105 = vmatpush1.msra.mxu0 0.0
    %106 = vmatprep.subr.mxu0 0.0
    %107 = vmatpush1.msra.mxu0 0.0
    %108 = vmatprep.subr.mxu0 0.0
    %109 = vmatpush1.msra.mxu0 0.0
    %110 = vmatprep.subr.mxu0 0.0
    %111 = vmatpush1.msra.mxu0 0.0
    %112 = vmatprep.subr.mxu0 0.0
    %113 = vmatpush1.msra.mxu0 0.0
    %114 = vmatprep.subr.mxu0 0.0
    %115 = vmatpush1.msra.mxu0 0.0
    %116 = vmatprep.subr.mxu0 0.0
    %117 = vmatpush1.msra.mxu0 0.0
    %118 = vmatprep.mubr.f32.mxu0 0.0
    %119 = vmatmul.mubr.f32.gmra.mrb[0].mxu0 %v36
    %v120 = vpop.f32.mrb[0].mxu0
    %v121 = vadd.f32 0.0, %v120
    %v122 = vpop.f32.mrb[0].mxu0
    %123 = vmatprep.mubr.f32.mxu0 0.0
    %124 = vmatmul.mubr.f32.gmra.mrb[0].mxu0 %v37
    %v125 = vpop.f32.mrb[0].mxu0
    %v126 = vadd.f32 0.0, %v125
    %v127 = vpop.f32.mrb[0].mxu0
    %128 = vdwg.mxu0
    %vm129 = vcmask 261120
    %v130 = vsel %vm129, %v121, 0.0
    %v131 = vsel %vm129, %v126, 0.0
    %v132 = vadd.f32 %v130, %v131
    %v133 = vrot.slane %v132, 4
    %v134 = vadd.f32 %v132, %v133
    %v135 = vrot.slane %v134, 2
    %v136 = vadd.f32 %v134, %v135
    %v137 = vrot.slane %v136, 1
    %v138 = vadd.f32 %v136, %v137
    %140 = vrot.lane.b32.xlu0 %v138, 124
    %v141 = vpop.permute.xlu0 %140
    %v143 = vadd.f32 %v138, %v141
    %144 = vrot.lane.b32.xlu0 %v138, 120
    %v145 = vpop.permute.xlu0 %144
    %v147 = vadd.f32 %v143, %v145
    %148 = vrot.lane.b32.xlu0 %v138, 116
    %v149 = vpop.permute.xlu0 %148
    %v151 = vadd.f32 %v147, %v149
    %152 = vrot.lane.b32.xlu0 %v138, 112
    %v153 = vpop.permute.xlu0 %152
    %v155 = vadd.f32 %v151, %v153
    %156 = vrot.lane.b32.xlu0 %v138, 108
    %v157 = vpop.permute.xlu0 %156
    %v159 = vadd.f32 %v155, %v157
    %160 = vrot.lane.b32.xlu0 %v138, 104
    %v161 = vpop.permute.xlu0 %160
    %v163 = vadd.f32 %v159, %v161
    %164 = vrot.lane.b32.xlu0 %v138, 100
    %v165 = vpop.permute.xlu0 %164
    %v167 = vadd.f32 %v163, %v165
    %v168 = vmul.f32 %v121, %v121
    %v169 = vmul.f32 %v126, %v126
    %v170 = vsel %vm129, %v168, 0.0
    %v171 = vsel %vm129, %v169, 0.0
    %v172 = vadd.f32 %v170, %v171
    %v173 = vrot.slane %v172, 4
    %v174 = vadd.f32 %v172, %v173
    %v175 = vrot.slane %v174, 2
    %v176 = vadd.f32 %v174, %v175
    %v177 = vrot.slane %v176, 1
    %v178 = vadd.f32 %v176, %v177
    %180 = vrot.lane.b32.xlu0 %v178, 124
    %v181 = vpop.permute.xlu0 %180
    %v183 = vadd.f32 %v178, %v181
    %184 = vrot.lane.b32.xlu0 %v178, 120
    %v185 = vpop.permute.xlu0 %184
    %v187 = vadd.f32 %v183, %v185
    %188 = vrot.lane.b32.xlu0 %v178, 116
    %v189 = vpop.permute.xlu0 %188
    %v191 = vadd.f32 %v187, %v189
    %192 = vrot.lane.b32.xlu0 %v178, 112
    %v193 = vpop.permute.xlu0 %192
    %v195 = vadd.f32 %v191, %v193
    %196 = vrot.lane.b32.xlu0 %v178, 108
    %v197 = vpop.permute.xlu0 %196
    %v199 = vadd.f32 %v195, %v197
    %200 = vrot.lane.b32.xlu0 %v178, 104
    %v201 = vpop.permute.xlu0 %200
    %v203 = vadd.f32 %v199, %v201
    %204 = vrot.lane.b32.xlu0 %v178, 100
    %v205 = vpop.permute.xlu0 %204
    %v207 = vadd.f32 %v203, %v205
    %v208 = vmul.f32 %v167, 0.0078125
    %v209 = vmul.f32 %v207, 0.0078125
    %v210 = vmul.f32 %v208, %v208
    %v211 = vsub.f32 %v209, %v210
    %v212 = vld [vmem:[%s4] sm:$0x1]
    %v213 = vadd.f32 %v211, 1e-05
    %v214 = vrsqrt.pop %v213
    %v215 = vmul.f32 %v212, %v214
    %v216 = vld [vmem:[%s5] sm:$0x1]
    %v217 = vmul.f32 %v208, %v215
    %v218 = vsub.f32 %v216, %v217
    %v220 = vlaneseq
    %v221 = vshrl.u32 %v220, 7
    %v222 = vsub.s32 0, %v221
    %v223 = vrot.slane %v215, %v222
    %224 = vrot.lane.b32.xlu0 %v223, 4
    %v225 = vpop.permute.xlu0 %224
    %227 = vrot.lane.b32.xlu0 %v223, 8
    %v228 = vpop.permute.xlu0 %227
    %230 = vrot.lane.b32.xlu0 %v223, 12
    %v231 = vpop.permute.xlu0 %230
    %233 = vrot.lane.b32.xlu0 %v223, 16
    %v234 = vpop.permute.xlu0 %233
    %236 = vrot.lane.b32.xlu0 %v223, 20
    %v237 = vpop.permute.xlu0 %236
    %239 = vrot.lane.b32.xlu0 %v223, 24
    %v240 = vpop.permute.xlu0 %239
    %242 = vrot.lane.b32.xlu0 %v223, 28
    %v243 = vpop.permute.xlu0 %242
    %vm245 = vcmask 31744
    %v246 = vsel %vm245, %v215, %v225
    %vm247 = vcmask 64512
    %v248 = vsel %vm247, %v246, %v228
    %vm249 = vcmask 97280
    %v250 = vsel %vm249, %v248, %v231
    %vm251 = vcmask 130048
    %v252 = vsel %vm251, %v250, %v234
    %vm253 = vcmask 162816
    %v254 = vsel %vm253, %v252, %v237
    %vm255 = vcmask 195584
    %v256 = vsel %vm255, %v254, %v240
    %vm257 = vcmask 228352
    %v258 = vsel %vm257, %v256, %v243
    %v260 = vlaneseq
    %v261 = vshrl.u32 %v260, 7
    %v262 = vsub.s32 0, %v261
    %v263 = vrot.slane %v218, %v262
    %264 = vrot.lane.b32.xlu0 %v263, 4
    %v265 = vpop.permute.xlu0 %264
    %267 = vrot.lane.b32.xlu0 %v263, 8
    %v268 = vpop.permute.xlu0 %267
    %270 = vrot.lane.b32.xlu0 %v263, 12
    %v271 = vpop.permute.xlu0 %270
    %273 = vrot.lane.b32.xlu0 %v263, 16
    %v274 = vpop.permute.xlu0 %273
    %276 = vrot.lane.b32.xlu0 %v263, 20
    %v277 = vpop.permute.xlu0 %276
    %279 = vrot.lane.b32.xlu0 %v263, 24
    %v280 = vpop.permute.xlu0 %279
    %282 = vrot.lane.b32.xlu0 %v263, 28
    %v283 = vpop.permute.xlu0 %282
    %v285 = vsel %vm245, %v218, %v265
    %v286 = vsel %vm247, %v285, %v268
    %v287 = vsel %vm249, %v286, %v271
    %v288 = vsel %vm251, %v287, %v274
    %v289 = vsel %vm253, %v288, %v277
    %v290 = vsel %vm255, %v289, %v280
    %v291 = vsel %vm257, %v290, %v283
    %v292 = vlaneseq
    %v293 = vshrl.u32 %v292, 7
    %v294 = vsub.s32 0, %v293
    %v295 = vrot.slane %v258, %v294
    %v296 = vmul.f32 %v121, %v295
    %v297 = vmul.f32 %v126, %v295
    %v298 = vlaneseq
    %v299 = vshrl.u32 %v298, 7
    %v300 = vsub.s32 0, %v299
    %v301 = vrot.slane %v291, %v300
    %v302 = vadd.f32 %v296, %v301
    %v303 = vadd.f32 %v297, %v301
    %v304 = vmax.f32 %v302, 0.0
    %v305 = vmax.f32 %v303, 0.0
    %v306 = vlaneseq
    %v307 = vshrl.u32 %v306, 7
    %v308 = vadd.s32 %v307, 8
    %vm309 = vcmp.lt.s32.totalorder %v307, 0
    %v310 = vsub.s32 0, %v307
    %v311 = vsel %vm309, %v310, %v307
    %v312 = vshrl.u32 %v311, 3
    %v313 = vand.u32 %v311, 7
    %v314 = vsub.s32 0, %v313
    %v315 = vsel %vm309, %v314, %v313
    %vm316 = vcmp.lt.s32.totalorder %v308, 0
    %v317 = vsub.s32 0, %v308
    %v318 = vsel %vm316, %v317, %v308
    %v319 = vshrl.u32 %v318, 3
    %v320 = vand.u32 %v318, 7
    %v321 = vsub.s32 0, %v320
    %v322 = vsel %vm316, %v321, %v320
    %vm323 = vcmp.ne.s32.totalorder %v315, 0
    %vm324 = vcmp.ne.s32.totalorder %v322, 0
    %vm325 = vcmp.lt.s32.totalorder %v315, 0
    %vm326 = vcmp.lt.s32.totalorder %v322, 0
    %vm327 = vmand %vm325, %vm323
    %vm328 = vmand %vm326, %vm324
    %v329 = vadd.s32 %v315, 8
    %v330 = vadd.s32 %v322, 8
    %v331 = vsel %vm327, %v329, %v315
    %v332 = vsel %vm328, %v330, %v322
    %v333 = vrot.slane %v304, 7
    %v334 = vrot.slane %v305, 7
    %vm335 = vcmp.lt.s32.totalorder %v307, 1
    %v336 = vsel %vm335, %v333, %v334
    %v337 = vsel %vm335, %v334, %v333
    %v338 = vadd.s32 %v331, 4294967295
    %v339 = vadd.s32 %v332, 4294967295
    %vm340 = vcmp.ge.s32.totalorder %v338, 0
    %vm341 = vcmp.ge.s32.totalorder %v339, 0
    %vm342 = vcmp.lt.s32.totalorder %v338, 8
    %vm343 = vcmp.lt.s32.totalorder %v339, 8
    %vm344 = vmand %vm340, %vm342
    %vm345 = vmand %vm341, %vm343
    %v346 = vsel %vm344, %v337, 0.0
    %v347 = vsel %vm345, %v336, 0.0
    %v348 = vrot.slane %v304, 1
    %v349 = vrot.slane %v305, 1
    %vm350 = vcmp.lt.s32.totalorder %v307, 7
    %v351 = vsel %vm350, %v348, %v349
    %v352 = vsel %vm350, %v349, %v348
    %v353 = vadd.s32 %v331, 1
    %v354 = vadd.s32 %v332, 1
    %vm355 = vcmp.ge.s32.totalorder %v353, 0
    %vm356 = vcmp.ge.s32.totalorder %v354, 0
    %vm357 = vcmp.lt.s32.totalorder %v353, 8
    %vm358 = vcmp.lt.s32.totalorder %v354, 8
    %vm359 = vmand %vm355, %vm357
    %vm360 = vmand %vm356, %vm358
    %v361 = vsel %vm359, %v351, 0.0
    %v362 = vsel %vm360, %v352, 0.0
    %365 = vrot.lane.b32.xlu0 %v304, 32
    %v366 = vpop.permute.xlu0 %365
    %367 = vrot.lane.b32.xlu0 %v305, 32
    %v368 = vpop.permute.xlu0 %367
    %373 = vrot.lane.b32.xlu0 %v361, 64
    %v374 = vpop.permute.xlu0 %373
    %375 = vrot.lane.b32.xlu0 %v362, 64
    %v376 = vpop.permute.xlu0 %375
    %v379 = vsel %vm129, %v346, %v366
    %v380 = vsel %vm129, %v347, %v368
    %vm381 = vcmask 523264
    %v382 = vsel %vm381, %v379, %v374
    %v383 = vsel %vm381, %v380, %v376
    %v384 = vld [vmem:[%s2] sm:$0xff]
    %v385 = vld [vmem:[%s2 + $0x8] sm:$0xff]
    %v386 = vld [vmem:[%s2 + $0x10] sm:$0xff]
    %v387 = vld [vmem:[%s2 + $0x18] sm:$0xff]
    %v388 = vld [vmem:[%s2 + $0x20] sm:$0xff]
    %v389 = vld [vmem:[%s2 + $0x28] sm:$0xff]
    %v390 = vld [vmem:[%s2 + $0x30] sm:$0xff]
    %v391 = vld [vmem:[%s2 + $0x38] sm:$0xff]
    %v392 = vld [vmem:[%s2 + $0x40] sm:$0xff]
    %v393 = vld [vmem:[%s2 + $0x48] sm:$0xff]
    %v394 = vld [vmem:[%s2 + $0x50] sm:$0xff]
    %v395 = vld [vmem:[%s2 + $0x58] sm:$0xff]
    %vm396 = vcmask 785408
    %v398 = vsel %vm396, %v382, 0
    %v401 = vsel %vm396, %v383, 0
    %403 = vmatprep.subr.mxu0 0.0
    %404 = vmatpush1.msra.mxu0 %v384
    %405 = vmatprep.subr.mxu0 0.0
    %406 = vmatpush1.msra.mxu0 %v385
    %407 = vmatprep.subr.mxu0 0.0
    %408 = vmatpush1.msra.mxu0 %v386
    %409 = vmatprep.subr.mxu0 0.0
    %410 = vmatpush1.msra.mxu0 %v387
    %411 = vmatprep.subr.mxu0 0.0
    %412 = vmatpush1.msra.mxu0 %v388
    %413 = vmatprep.subr.mxu0 0.0
    %414 = vmatpush1.msra.mxu0 %v389
    %415 = vmatprep.subr.mxu0 0.0
    %416 = vmatpush1.msra.mxu0 %v390
    %417 = vmatprep.subr.mxu0 0.0
    %418 = vmatpush1.msra.mxu0 %v391
    %419 = vmatprep.subr.mxu0 0.0
    %420 = vmatpush1.msra.mxu0 %v392
    %421 = vmatprep.subr.mxu0 0.0
    %422 = vmatpush1.msra.mxu0 %v393
    %423 = vmatprep.subr.mxu0 0.0
    %424 = vmatpush1.msra.mxu0 %v394
    %425 = vmatprep.subr.mxu0 0.0
    %426 = vmatpush1.msra.mxu0 %v395
    %427 = vmatprep.subr.mxu0 0.0
    %428 = vmatpush1.msra.mxu0 0.0
    %429 = vmatprep.subr.mxu0 0.0
    %430 = vmatpush1.msra.mxu0 0.0
    %431 = vmatprep.subr.mxu0 0.0
    %432 = vmatpush1.msra.mxu0 0.0
    %433 = vmatprep.subr.mxu0 0.0
    %434 = vmatpush1.msra.mxu0 0.0
    %435 = vmatprep.subr.mxu0 0.0
    %436 = vmatpush1.msra.mxu0 0.0
    %437 = vmatprep.subr.mxu0 0.0
    %438 = vmatpush1.msra.mxu0 0.0
    %439 = vmatprep.subr.mxu0 0.0
    %440 = vmatpush1.msra.mxu0 0.0
    %441 = vmatprep.subr.mxu0 0.0
    %442 = vmatpush1.msra.mxu0 0.0
    %443 = vmatprep.subr.mxu0 0.0
    %444 = vmatpush1.msra.mxu0 0.0
    %445 = vmatprep.subr.mxu0 0.0
    %446 = vmatpush1.msra.mxu0 0.0
    %447 = vmatprep.subr.mxu0 0.0
    %448 = vmatpush1.msra.mxu0 0.0
    %449 = vmatprep.subr.mxu0 0.0
    %450 = vmatpush1.msra.mxu0 0.0
    %451 = vmatprep.subr.mxu0 0.0
    %452 = vmatpush1.msra.mxu0 0.0
    %453 = vmatprep.subr.mxu0 0.0
    %454 = vmatpush1.msra.mxu0 0.0
    %455 = vmatprep.subr.mxu0 0.0
    %456 = vmatpush1.msra.mxu0 0.0
    %457 = vmatprep.subr.mxu0 0.0
    %458 = vmatpush1.msra.mxu0 0.0
    %459 = vmatprep.subr.mxu0 0.0
    %460 = vmatpush1.msra.mxu0 0.0
    %461 = vmatprep.subr.mxu0 0.0
    %462 = vmatpush1.msra.mxu0 0.0
    %463 = vmatprep.subr.mxu0 0.0
    %464 = vmatpush1.msra.mxu0 0.0
    %465 = vmatprep.subr.mxu0 0.0
    %466 = vmatpush1.msra.mxu0 0.0
    %467 = vmatprep.mubr.f32.mxu0 0.0
    %468 = vmatmul.mubr.f32.gmra.mrb[0].mxu0 %v398
    %v469 = vpop.f32.mrb[0].mxu0
    %v470 = vadd.f32 0.0, %v469
    %v471 = vpop.f32.mrb[0].mxu0
    %472 = vmatprep.mubr.f32.mxu0 0.0
    %473 = vmatmul.mubr.f32.gmra.mrb[0].mxu0 %v401
    %v474 = vpop.f32.mrb[0].mxu0
    %v475 = vadd.f32 0.0, %v474
    %v476 = vpop.f32.mrb[0].mxu0
    %477 = vdwg.mxu0
    %v478 = vsel %vm129, %v470, 0.0
    %v479 = vsel %vm129, %v475, 0.0
    %v480 = vadd.f32 %v478, %v479
    %v481 = vrot.slane %v480, 4
    %v482 = vadd.f32 %v480, %v481
    %v483 = vrot.slane %v482, 2
    %v484 = vadd.f32 %v482, %v483
    %v485 = vrot.slane %v484, 1
    %v486 = vadd.f32 %v484, %v485
    %488 = vrot.lane.b32.xlu0 %v486, 124
    %v489 = vpop.permute.xlu0 %488
    %v491 = vadd.f32 %v486, %v489
    %492 = vrot.lane.b32.xlu0 %v486, 120
    %v493 = vpop.permute.xlu0 %492
    %v495 = vadd.f32 %v491, %v493
    %496 = vrot.lane.b32.xlu0 %v486, 116
    %v497 = vpop.permute.xlu0 %496
    %v499 = vadd.f32 %v495, %v497
    %500 = vrot.lane.b32.xlu0 %v486, 112
    %v501 = vpop.permute.xlu0 %500
    %v503 = vadd.f32 %v499, %v501
    %504 = vrot.lane.b32.xlu0 %v486, 108
    %v505 = vpop.permute.xlu0 %504
    %v507 = vadd.f32 %v503, %v505
    %508 = vrot.lane.b32.xlu0 %v486, 104
    %v509 = vpop.permute.xlu0 %508
    %v511 = vadd.f32 %v507, %v509
    %512 = vrot.lane.b32.xlu0 %v486, 100
    %v513 = vpop.permute.xlu0 %512
    %v515 = vadd.f32 %v511, %v513
    %v516 = vmul.f32 %v470, %v470
    %v517 = vmul.f32 %v475, %v475
    %v518 = vsel %vm129, %v516, 0.0
    %v519 = vsel %vm129, %v517, 0.0
    %v520 = vadd.f32 %v518, %v519
    %v521 = vrot.slane %v520, 4
    %v522 = vadd.f32 %v520, %v521
    %v523 = vrot.slane %v522, 2
    %v524 = vadd.f32 %v522, %v523
    %v525 = vrot.slane %v524, 1
    %v526 = vadd.f32 %v524, %v525
    %528 = vrot.lane.b32.xlu0 %v526, 124
    %v529 = vpop.permute.xlu0 %528
    %v531 = vadd.f32 %v526, %v529
    %532 = vrot.lane.b32.xlu0 %v526, 120
    %v533 = vpop.permute.xlu0 %532
    %v535 = vadd.f32 %v531, %v533
    %536 = vrot.lane.b32.xlu0 %v526, 116
    %v537 = vpop.permute.xlu0 %536
    %v539 = vadd.f32 %v535, %v537
    %540 = vrot.lane.b32.xlu0 %v526, 112
    %v541 = vpop.permute.xlu0 %540
    %v543 = vadd.f32 %v539, %v541
    %544 = vrot.lane.b32.xlu0 %v526, 108
    %v545 = vpop.permute.xlu0 %544
    %v547 = vadd.f32 %v543, %v545
    %548 = vrot.lane.b32.xlu0 %v526, 104
    %v549 = vpop.permute.xlu0 %548
    %v551 = vadd.f32 %v547, %v549
    %552 = vrot.lane.b32.xlu0 %v526, 100
    %v553 = vpop.permute.xlu0 %552
    %v555 = vadd.f32 %v551, %v553
    %v556 = vmul.f32 %v515, 0.0078125
    %v557 = vmul.f32 %v555, 0.0078125
    %v558 = vmul.f32 %v556, %v556
    %v559 = vsub.f32 %v557, %v558
    %v560 = vld [vmem:[%s6] sm:$0x1]
    %v561 = vadd.f32 %v559, 1e-05
    %v562 = vrsqrt.pop %v561
    %v563 = vmul.f32 %v560, %v562
    %v564 = vld [vmem:[%s7] sm:$0x1]
    %v565 = vmul.f32 %v556, %v563
    %v566 = vsub.f32 %v564, %v565
    %v568 = vlaneseq
    %v569 = vshrl.u32 %v568, 7
    %v570 = vsub.s32 0, %v569
    %v571 = vrot.slane %v563, %v570
    %572 = vrot.lane.b32.xlu0 %v571, 4
    %v573 = vpop.permute.xlu0 %572
    %575 = vrot.lane.b32.xlu0 %v571, 8
    %v576 = vpop.permute.xlu0 %575
    %578 = vrot.lane.b32.xlu0 %v571, 12
    %v579 = vpop.permute.xlu0 %578
    %581 = vrot.lane.b32.xlu0 %v571, 16
    %v582 = vpop.permute.xlu0 %581
    %584 = vrot.lane.b32.xlu0 %v571, 20
    %v585 = vpop.permute.xlu0 %584
    %587 = vrot.lane.b32.xlu0 %v571, 24
    %v588 = vpop.permute.xlu0 %587
    %590 = vrot.lane.b32.xlu0 %v571, 28
    %v591 = vpop.permute.xlu0 %590
    %v593 = vsel %vm245, %v563, %v573
    %v594 = vsel %vm247, %v593, %v576
    %v595 = vsel %vm249, %v594, %v579
    %v596 = vsel %vm251, %v595, %v582
    %v597 = vsel %vm253, %v596, %v585
    %v598 = vsel %vm255, %v597, %v588
    %v599 = vsel %vm257, %v598, %v591
    %v601 = vlaneseq
    %v602 = vshrl.u32 %v601, 7
    %v603 = vsub.s32 0, %v602
    %v604 = vrot.slane %v566, %v603
    %605 = vrot.lane.b32.xlu0 %v604, 4
    %v606 = vpop.permute.xlu0 %605
    %608 = vrot.lane.b32.xlu0 %v604, 8
    %v609 = vpop.permute.xlu0 %608
    %611 = vrot.lane.b32.xlu0 %v604, 12
    %v612 = vpop.permute.xlu0 %611
    %614 = vrot.lane.b32.xlu0 %v604, 16
    %v615 = vpop.permute.xlu0 %614
    %617 = vrot.lane.b32.xlu0 %v604, 20
    %v618 = vpop.permute.xlu0 %617
    %620 = vrot.lane.b32.xlu0 %v604, 24
    %v621 = vpop.permute.xlu0 %620
    %623 = vrot.lane.b32.xlu0 %v604, 28
    %v624 = vpop.permute.xlu0 %623
    %v626 = vsel %vm245, %v566, %v606
    %v627 = vsel %vm247, %v626, %v609
    %v628 = vsel %vm249, %v627, %v612
    %v629 = vsel %vm251, %v628, %v615
    %v630 = vsel %vm253, %v629, %v618
    %v631 = vsel %vm255, %v630, %v621
    %v632 = vsel %vm257, %v631, %v624
    %v633 = vlaneseq
    %v634 = vshrl.u32 %v633, 7
    %v635 = vsub.s32 0, %v634
    %v636 = vrot.slane %v599, %v635
    %v637 = vmul.f32 %v470, %v636
    %v638 = vmul.f32 %v475, %v636
    %v639 = vlaneseq
    %v640 = vshrl.u32 %v639, 7
    %v641 = vsub.s32 0, %v640
    %v642 = vrot.slane %v632, %v641
    %v643 = vadd.f32 %v637, %v642
    %v644 = vadd.f32 %v638, %v642
    %v645 = vmax.f32 %v643, 0.0
    %v646 = vmax.f32 %v644, 0.0
    %v647 = vld [vmem:[%s3] sm:$0xff]
    %v648 = vld [vmem:[%s3 + $0x8] sm:$0xff]
    %v649 = vld [vmem:[%s3 + $0x10] sm:$0xff]
    %v650 = vld [vmem:[%s3 + $0x18] sm:$0xff]
    %v652 = vsel %vm129, %v645, 0
    %v655 = vsel %vm129, %v646, 0
    %657 = vmatprep.subr.mxu0 0.0
    %658 = vmatpush1.msra.mxu0 %v647
    %659 = vmatprep.subr.mxu0 0.0
    %660 = vmatpush1.msra.mxu0 %v648
    %661 = vmatprep.subr.mxu0 0.0
    %662 = vmatpush1.msra.mxu0 %v649
    %663 = vmatprep.subr.mxu0 0.0
    %664 = vmatpush1.msra.mxu0 %v650
    %665 = vmatprep.subr.mxu0 0.0
    %666 = vmatpush1.msra.mxu0 0.0
    %667 = vmatprep.subr.mxu0 0.0
    %668 = vmatpush1.msra.mxu0 0.0
    %669 = vmatprep.subr.mxu0 0.0
    %670 = vmatpush1.msra.mxu0 0.0
    %671 = vmatprep.subr.mxu0 0.0
    %672 = vmatpush1.msra.mxu0 0.0
    %673 = vmatprep.subr.mxu0 0.0
    %674 = vmatpush1.msra.mxu0 0.0
    %675 = vmatprep.subr.mxu0 0.0
    %676 = vmatpush1.msra.mxu0 0.0
    %677 = vmatprep.subr.mxu0 0.0
    %678 = vmatpush1.msra.mxu0 0.0
    %679 = vmatprep.subr.mxu0 0.0
    %680 = vmatpush1.msra.mxu0 0.0
    %681 = vmatprep.subr.mxu0 0.0
    %682 = vmatpush1.msra.mxu0 0.0
    %683 = vmatprep.subr.mxu0 0.0
    %684 = vmatpush1.msra.mxu0 0.0
    %685 = vmatprep.subr.mxu0 0.0
    %686 = vmatpush1.msra.mxu0 0.0
    %687 = vmatprep.subr.mxu0 0.0
    %688 = vmatpush1.msra.mxu0 0.0
    %689 = vmatprep.subr.mxu0 0.0
    %690 = vmatpush1.msra.mxu0 0.0
    %691 = vmatprep.subr.mxu0 0.0
    %692 = vmatpush1.msra.mxu0 0.0
    %693 = vmatprep.subr.mxu0 0.0
    %694 = vmatpush1.msra.mxu0 0.0
    %695 = vmatprep.subr.mxu0 0.0
    %696 = vmatpush1.msra.mxu0 0.0
    %697 = vmatprep.subr.mxu0 0.0
    %698 = vmatpush1.msra.mxu0 0.0
    %699 = vmatprep.subr.mxu0 0.0
    %700 = vmatpush1.msra.mxu0 0.0
    %701 = vmatprep.subr.mxu0 0.0
    %702 = vmatpush1.msra.mxu0 0.0
    %703 = vmatprep.subr.mxu0 0.0
    %704 = vmatpush1.msra.mxu0 0.0
    %705 = vmatprep.subr.mxu0 0.0
    %706 = vmatpush1.msra.mxu0 0.0
    %707 = vmatprep.subr.mxu0 0.0
    %708 = vmatpush1.msra.mxu0 0.0
    %709 = vmatprep.subr.mxu0 0.0
    %710 = vmatpush1.msra.mxu0 0.0
    %711 = vmatprep.subr.mxu0 0.0
    %712 = vmatpush1.msra.mxu0 0.0
    %713 = vmatprep.subr.mxu0 0.0
    %714 = vmatpush1.msra.mxu0 0.0
    %715 = vmatprep.subr.mxu0 0.0
    %716 = vmatpush1.msra.mxu0 0.0
    %717 = vmatprep.subr.mxu0 0.0
    %718 = vmatpush1.msra.mxu0 0.0
    %719 = vmatprep.subr.mxu0 0.0
    %720 = vmatpush1.msra.mxu0 0.0
    %721 = vmatprep.mubr.f32.mxu0 0.0
    %722 = vmatmul.mubr.f32.gmra.mrb[0].mxu0 %v652
    %v723 = vpop.f32.mrb[0].mxu0
    %v724 = vadd.f32 0.0, %v723
    %v725 = vpop.f32.mrb[0].mxu0
    %726 = vmatprep.mubr.f32.mxu0 0.0
    %727 = vmatmul.mubr.f32.gmra.mrb[0].mxu0 %v655
    %v728 = vpop.f32.mrb[0].mxu0
    %v729 = vadd.f32 0.0, %v728
    %v730 = vpop.f32.mrb[0].mxu0
    %731 = vdwg.mxu0
    %v732 = vadd.f32 %v724, %v729
    %v733 = vrot.slane %v732, 4
    %v734 = vadd.f32 %v732, %v733
    %v735 = vrot.slane %v734, 2
    %v736 = vadd.f32 %v734, %v735
    %v737 = vrot.slane %v736, 1
    %v738 = vadd.f32 %v736, %v737
    %740 = vrot.lane.b32.xlu0 %v738, 112
    %v741 = vpop.permute.xlu0 %740
    %v743 = vadd.f32 %v738, %v741
    %744 = vrot.lane.b32.xlu0 %v738, 96
    %v745 = vpop.permute.xlu0 %744
    %v747 = vadd.f32 %v743, %v745
    %748 = vrot.lane.b32.xlu0 %v738, 80
    %v749 = vpop.permute.xlu0 %748
    %v751 = vadd.f32 %v747, %v749
    %752 = vrot.lane.b32.xlu0 %v738, 64
    %v753 = vpop.permute.xlu0 %752
    %v755 = vadd.f32 %v751, %v753
    %756 = vrot.lane.b32.xlu0 %v738, 48
    %v757 = vpop.permute.xlu0 %756
    %v759 = vadd.f32 %v755, %v757
    %760 = vrot.lane.b32.xlu0 %v738, 32
    %v761 = vpop.permute.xlu0 %760
    %v763 = vadd.f32 %v759, %v761
    %764 = vrot.lane.b32.xlu0 %v738, 16
    %v765 = vpop.permute.xlu0 %764
    %v767 = vadd.f32 %v763, %v765
    %v768 = vmul.f32 %v724, %v724
    %v769 = vmul.f32 %v729, %v729
    %v770 = vadd.f32 %v768, %v769
    %v771 = vrot.slane %v770, 4
    %v772 = vadd.f32 %v770, %v771
    %v773 = vrot.slane %v772, 2
    %v774 = vadd.f32 %v772, %v773
    %v775 = vrot.slane %v774, 1
    %v776 = vadd.f32 %v774, %v775
    %778 = vrot.lane.b32.xlu0 %v776, 112
    %v779 = vpop.permute.xlu0 %778
    %v781 = vadd.f32 %v776, %v779
    %782 = vrot.lane.b32.xlu0 %v776, 96
    %v783 = vpop.permute.xlu0 %782
    %v785 = vadd.f32 %v781, %v783
    %786 = vrot.lane.b32.xlu0 %v776, 80
    %v787 = vpop.permute.xlu0 %786
    %v789 = vadd.f32 %v785, %v787
    %790 = vrot.lane.b32.xlu0 %v776, 64
    %v791 = vpop.permute.xlu0 %790
    %v793 = vadd.f32 %v789, %v791
    %794 = vrot.lane.b32.xlu0 %v776, 48
    %v795 = vpop.permute.xlu0 %794
    %v797 = vadd.f32 %v793, %v795
    %798 = vrot.lane.b32.xlu0 %v776, 32
    %v799 = vpop.permute.xlu0 %798
    %v801 = vadd.f32 %v797, %v799
    %802 = vrot.lane.b32.xlu0 %v776, 16
    %v803 = vpop.permute.xlu0 %802
    %v805 = vadd.f32 %v801, %v803
    %v806 = vmul.f32 %v767, 0.0078125
    %v807 = vmul.f32 %v805, 0.0078125
    %v808 = vmul.f32 %v806, %v806
    %v809 = vsub.f32 %v807, %v808
    %v810 = vld [vmem:[%s8] sm:$0x1]
    %v811 = vadd.f32 %v809, 1e-05
    %v812 = vrsqrt.pop %v811
    %v813 = vmul.f32 %v810, %v812
    %v814 = vld [vmem:[%s9] sm:$0x1]
    %v815 = vmul.f32 %v806, %v813
    %v816 = vsub.f32 %v814, %v815
    %v818 = vlaneseq
    %v819 = vshrl.u32 %v818, 7
    %v820 = vsub.s32 0, %v819
    %v821 = vrot.slane %v813, %v820
    %822 = vrot.lane.b32.xlu0 %v821, 16
    %v823 = vpop.permute.xlu0 %822
    %825 = vrot.lane.b32.xlu0 %v821, 32
    %v826 = vpop.permute.xlu0 %825
    %828 = vrot.lane.b32.xlu0 %v821, 48
    %v829 = vpop.permute.xlu0 %828
    %831 = vrot.lane.b32.xlu0 %v821, 64
    %v832 = vpop.permute.xlu0 %831
    %834 = vrot.lane.b32.xlu0 %v821, 80
    %v835 = vpop.permute.xlu0 %834
    %837 = vrot.lane.b32.xlu0 %v821, 96
    %v838 = vpop.permute.xlu0 %837
    %840 = vrot.lane.b32.xlu0 %v821, 112
    %v841 = vpop.permute.xlu0 %840
    %v843 = vsel %vm251, %v813, %v823
    %v844 = vsel %vm129, %v843, %v826
    %vm845 = vcmask 392192
    %v846 = vsel %vm845, %v844, %v829
    %v847 = vsel %vm381, %v846, %v832
    %vm848 = vcmask 654336
    %v849 = vsel %vm848, %v847, %v835
    %v850 = vsel %vm396, %v849, %v838
    %vm851 = vcmask 916480
    %v852 = vsel %vm851, %v850, %v841
    %v854 = vlaneseq
    %v855 = vshrl.u32 %v854, 7
    %v856 = vsub.s32 0, %v855
    %v857 = vrot.slane %v816, %v856
    %858 = vrot.lane.b32.xlu0 %v857, 16
    %v859 = vpop.permute.xlu0 %858
    %861 = vrot.lane.b32.xlu0 %v857, 32
    %v862 = vpop.permute.xlu0 %861
    %864 = vrot.lane.b32.xlu0 %v857, 48
    %v865 = vpop.permute.xlu0 %864
    %867 = vrot.lane.b32.xlu0 %v857, 64
    %v868 = vpop.permute.xlu0 %867
    %870 = vrot.lane.b32.xlu0 %v857, 80
    %v871 = vpop.permute.xlu0 %870
    %873 = vrot.lane.b32.xlu0 %v857, 96
    %v874 = vpop.permute.xlu0 %873
    %876 = vrot.lane.b32.xlu0 %v857, 112
    %v877 = vpop.permute.xlu0 %876
    %v879 = vsel %vm251, %v816, %v859
    %v880 = vsel %vm129, %v879, %v862
    %v881 = vsel %vm845, %v880, %v865
    %v882 = vsel %vm381, %v881, %v868
    %v883 = vsel %vm848, %v882, %v871
    %v884 = vsel %vm396, %v883, %v874
    %v885 = vsel %vm851, %v884, %v877
    %v886 = vlaneseq
    %v887 = vshrl.u32 %v886, 7
    %v888 = vsub.s32 0, %v887
    %v889 = vrot.slane %v852, %v888
    %v890 = vmul.f32 %v724, %v889
    %v891 = vmul.f32 %v729, %v889
    %v892 = vlaneseq
    %v893 = vshrl.u32 %v892, 7
    %v894 = vsub.s32 0, %v893
    %v895 = vrot.slane %v885, %v894
    %v896 = vadd.f32 %v890, %v895
    %v897 = vadd.f32 %v891, %v895
    %v898 = vadd.f32 %v896, %v36
    %v899 = vadd.f32 %v897, %v37
    %v900 = vmax.f32 %v898, 0.0
    %v901 = vmax.f32 %v899, 0.0
    %902 = vst [vmem:[#allocation2] sm:$0xff] %v900
    %903 = vst [vmem:[#allocation2 + $0x8] sm:$0xff] %v901
    // Predicated region
    $region42: #{tpu_custom_call.1} parent=1 // pred_check
      _
    $region43: #{tpu_custom_call.1} parent=1 // pred_check_branch
      %905 = sbr.rel (0) target = $region45
    $region44: #{tpu_custom_call.1} parent=1 // pred_region
      %s907 = ssub.s32 256, 256
      %908 = vsyncadd [#allocation3], %s907
      %s909 = sshll.u32 [#allocation2], 4
      %s910 = int_to_ptr.vmem [resolvable:$true] %s909
      %915 = dma.vmem_to_hbm [thread:$0]  %s910, 256, %s10, [#allocation3], 128, 128, 8
    $region45: #{tpu_custom_call.1} parent=1 // pred_fallthru
      _
    // Predicated region
    $region46: #{tpu_custom_call.1} parent=1 // pred_check
      _
    $region47: #{tpu_custom_call.1} parent=1 // pred_check_branch
      %917 = sbr.rel (0) target = $region49
    $region48: #{tpu_custom_call.1} parent=1 // pred_region
      %918 = dma.done [#allocation3], 256
    $region49: #{tpu_custom_call.1} parent=1 // pred_fallthru
      _
    %919 = vsyncpa [#allocation3], 1

</llo_original>
